<compile_context>
chip_gen: v7x
topology: tpu7x:2x2x1
jax: 0.10.0
libtpu: 0.0.40
codegen_flags: <defaults>
</compile_context>

<pallas_src>
import functools

import jax
import jax.numpy as jnp
from jax.experimental import pallas as pl
from jax.experimental.pallas import tpu as pltpu


def _round_up(v, m):
    return (v + m - 1) // m * m


def _attn_pool_kernel(x_ref, w_ref, q_ref, o_ref, m_sc, l_sc, acc_sc,
                      *, n_valid, tile_n, n_padded):
    """One (set b, N-tile i) grid step of online-softmax attention pooling.

    x_ref : (1, TN, Dp) neighbor-embedding tile (native dtype)
    w_ref : (Dp, Hp)    resident across the grid
    q_ref : (Hp, 1)     resident across the grid
    o_ref : (1, 1, Dp)  output block (written only on the last N tile)
    m_sc, l_sc : (1, 1) f32  running max / running softmax denominator
    acc_sc     : (1, Dp) f32 running attention-weighted sum
    """
    i = pl.program_id(1)

    @pl.when(i == 0)
    def _init():
        m_sc[...] = jnp.full_like(m_sc, -jnp.inf)
        l_sc[...] = jnp.zeros_like(l_sc)
        acc_sc[...] = jnp.zeros_like(acc_sc)

    x = x_ref[0]                                   # (TN, Dp), input dtype

    # hidden = relu(x @ W) on the MXU, f32 accumulation.
    h = jnp.maximum(
        jnp.dot(x, w_ref[...], preferred_element_type=jnp.float32), 0.0)
    # scores = hidden @ q -> (TN, 1)
    s = jnp.dot(h, q_ref[...].astype(jnp.float32),
                preferred_element_type=jnp.float32)

    if n_padded != n_valid:
        # Mask zero-padded neighbor rows out of the softmax.
        row = jax.lax.broadcasted_iota(jnp.int32, s.shape, 0) + i * tile_n
        s = jnp.where(row < n_valid, s, -jnp.inf)

    # Online softmax update.
    m_prev = m_sc[...]                                        # (1, 1)
    m_new = jnp.maximum(m_prev, jnp.max(s, axis=0, keepdims=True))
    alpha = jnp.exp(m_prev - m_new)                           # (1, 1)
    p = jnp.exp(s - m_new)                                    # (TN, 1)
    l_sc[...] = alpha * l_sc[...] + jnp.sum(p, axis=0, keepdims=True)

    # Attention-weighted partial sum on the MXU: p^T @ x -> (1, Dp).
    part = jax.lax.dot_general(
        p.astype(x.dtype), x,
        dimension_numbers=(((0,), (0,)), ((), ())),
        preferred_element_type=jnp.float32)
    acc_sc[...] = alpha * acc_sc[...] + part
    m_sc[...] = m_new

    @pl.when(i == pl.num_programs(1) - 1)
    def _finalize():
        inv_l = pl.reciprocal(l_sc[...])          # one scalar reciprocal/set
        o_ref[0] = (acc_sc[...] * inv_l).astype(o_ref.dtype)


def attention_pool_batched(x, w, q, *, tile_n=None):
    """Batched set-attention pooling.

    x: (B, N, D) neighbor embeddings per set
    w: (D, H)    == PyTorch W.weight.T
    q: (H, 1)    == PyTorch q.weight.T
    returns (B, D)
    """
    b, n, d = x.shape
    dw, h = w.shape
    assert dw == d and q.shape == (h, 1)

    # Lane-dense padding (vreg lane width / MXU width = 128).
    d_pad = _round_up(d, 128)
    h_pad = _round_up(h, 128)

    # N tile: multiple of 8 sublanes; default sized for HBM-roofline streaming
    # on 64-128 MiB VMEM parts (sweep per generation).
    if tile_n is None:
        tile_n = 512
    tile_n = max(8, _round_up(min(tile_n, _round_up(n, 8)), 8))
    n_pad = _round_up(n, tile_n)

    xp = jnp.zeros((b, n_pad, d_pad), x.dtype).at[:, :n, :d].set(x)
    wp = jnp.zeros((d_pad, h_pad), w.dtype).at[:d, :h].set(w)
    qp = jnp.zeros((h_pad, 1), q.dtype).at[:h, :].set(q)

    # Explicit VMEM budget: double-buffered x tile + resident w/q + output +
    # f32 scratch, with headroom (re-derive tile for v7x's 64 MiB part).
    x_isz = jnp.dtype(x.dtype).itemsize
    est = (2 * tile_n * d_pad * x_isz
           + 2 * d_pad * h_pad * jnp.dtype(w.dtype).itemsize
           + 2 * h_pad * jnp.dtype(q.dtype).itemsize
           + 2 * d_pad * x_isz
           + (d_pad + 2) * 4)
    vmem_limit = int(min(max(4 * est, 16 * 1024 * 1024), 64 * 1024 * 1024))

    grid = (b, pl.cdiv(n_pad, tile_n))
    kernel = functools.partial(
        _attn_pool_kernel, n_valid=n, tile_n=tile_n, n_padded=n_pad)

    out = pl.pallas_call(
        kernel,
        out_shape=jax.ShapeDtypeStruct((b, 1, d_pad), x.dtype),
        grid=grid,
        in_specs=[
            pl.BlockSpec((1, tile_n, d_pad), lambda bi, ni: (bi, ni, 0)),
            pl.BlockSpec((d_pad, h_pad), lambda bi, ni: (0, 0)),  # resident
            pl.BlockSpec((h_pad, 1), lambda bi, ni: (0, 0)),      # resident
        ],
        out_specs=pl.BlockSpec((1, 1, d_pad), lambda bi, ni: (bi, 0, 0)),
        scratch_shapes=[
            pltpu.VMEM((1, 1), jnp.float32),       # running max
            pltpu.VMEM((1, 1), jnp.float32),       # running denominator
            pltpu.VMEM((1, d_pad), jnp.float32),   # weighted-sum accumulator
        ],
        compiler_params=pltpu.CompilerParams(
            dimension_semantics=("parallel", "arbitrary"),
            vmem_limit_bytes=vmem_limit,
        ),
    )(xp, wp, qp)

    return out[:, 0, :d]


def attention_pool(x, w, q, *, tile_n=None):
    """Single-set convenience wrapper: x (N, D) -> (D,)."""
    return attention_pool_batched(x[None], w, q, tile_n=tile_n)[0]


def attention_pool_ref(x, w, q):
    """Pure-JAX reference matching the PyTorch forward exactly."""
    scores = jnp.maximum(x @ w, 0.0) @ q            # (N, 1)
    weights = jax.nn.softmax(scores, axis=0)        # softmax over dim 0
    return jnp.sum(weights * x, axis=0)             # (D,)


if __name__ == "__main__":
    B, N, INPUT_DIM, HIDDEN_DIM = 2, 20, 32, 32

    key = jax.random.PRNGKey(0)
    kx, kw, kq = jax.random.split(key, 3)

    x = jax.random.normal(kx, (B, N, INPUT_DIM), dtype=jnp.float32)
    w = jax.random.normal(kw, (INPUT_DIM, HIDDEN_DIM), dtype=jnp.float32) * 0.1
    q = jax.random.normal(kq, (HIDDEN_DIM, 1), dtype=jnp.float32) * 0.1

    # Small tile so the test exercises multi-tile online softmax plus a ragged
    # (masked) final tile: 20 neighbors -> 3 tiles of 8 with 4 padded rows.
    out = attention_pool_batched(x, w, q, tile_n=8)
    out = jax.block_until_ready(out)

    ref = jax.vmap(lambda xb: attention_pool_ref(xb, w, q))(x)
    assert out.shape == (B, INPUT_DIM)
    assert jnp.allclose(out, ref, atol=1e-5, rtol=1e-5), "batched mismatch"

    # Single-set path with default tiling.
    out1 = jax.block_until_ready(attention_pool(x[0], w, q))
    assert out1.shape == (INPUT_DIM,)
    assert jnp.allclose(out1, ref[0], atol=1e-5, rtol=1e-5), "single mismatch"

    print("KERNEL_OK")
</pallas_src>

<mosaic_0001>
module attributes {stable_mosaic.version = 11 : i64} {
  func.func @_attn_pool_kernel(%arg0: i32, %arg1: i32, %arg2: memref<1x8x128xf32, #tpu.memory_space<vmem>>, %arg3: memref<128x128xf32, #tpu.memory_space<vmem>>, %arg4: memref<128x1xf32, #tpu.memory_space<vmem>>, %arg5: memref<1x1x128xf32, #tpu.memory_space<vmem>>, %arg6: memref<1x1xf32, #tpu.memory_space<vmem>>, %arg7: memref<1x1xf32, #tpu.memory_space<vmem>>, %arg8: memref<1x128xf32, #tpu.memory_space<vmem>>) attributes {dimension_semantics = [#tpu.dimension_semantics<parallel>, #tpu.dimension_semantics<arbitrary>], iteration_bounds = array<i64: 2, 3>, scalar_prefetch = 0 : i64, scratch_operands = 3 : i64, tpu.core_type = #tpu.core_type<tc>, window_params = [{transform_indices = @transform_0, window_bounds = array<i64: 1, 8, 128>}, {pipeline_mode = #tpu.pipeline_mode<synchronous>, transform_indices = @transform_1, window_bounds = array<i64: 128, 128>}, {pipeline_mode = #tpu.pipeline_mode<synchronous>, transform_indices = @transform_2, window_bounds = array<i64: 128, 1>}, {transform_indices = @transform_3, window_bounds = array<i64: 1, 1, 128>}]} {
    %c0_i32 = arith.constant 0 : i32
    %0 = arith.cmpi eq, %arg1, %c0_i32 : i32
    %1 = arith.extui %0 : i1 to i32
    %c0_i32_0 = arith.constant 0 : i32
    %2 = arith.cmpi ne, %1, %c0_i32_0 : i32
    scf.if %2 {
      %cst_26 = arith.constant 0xFF800000 : f32
      %44 = vector.broadcast %cst_26 : f32 to vector<1x1xf32>
      %c0_27 = arith.constant 0 : index
      %c0_28 = arith.constant 0 : index
      %45 = vector.load %arg6[%c0_27, %c0_28] : memref<1x1xf32, #tpu.memory_space<vmem>>, vector<1x1xf32>
      tpu.vector_store %arg6[%c0_27, %c0_28], %44 {strides = array<i32>} : memref<1x1xf32, #tpu.memory_space<vmem>>, vector<1x1xf32>,
      %cst_29 = arith.constant 0.000000e+00 : f32
      %46 = vector.broadcast %cst_29 : f32 to vector<1x1xf32>
      %c0_30 = arith.constant 0 : index
      %c0_31 = arith.constant 0 : index
      %47 = vector.load %arg7[%c0_30, %c0_31] : memref<1x1xf32, #tpu.memory_space<vmem>>, vector<1x1xf32>
      tpu.vector_store %arg7[%c0_30, %c0_31], %46 {strides = array<i32>} : memref<1x1xf32, #tpu.memory_space<vmem>>, vector<1x1xf32>,
      %cst_32 = arith.constant 0.000000e+00 : f32
      %48 = vector.broadcast %cst_32 : f32 to vector<1x128xf32>
      %c0_33 = arith.constant 0 : index
      %c0_34 = arith.constant 0 : index
      %49 = vector.load %arg8[%c0_33, %c0_34] : memref<1x128xf32, #tpu.memory_space<vmem>>, vector<1x128xf32>
      tpu.vector_store %arg8[%c0_33, %c0_34], %48 {strides = array<i32>} : memref<1x128xf32, #tpu.memory_space<vmem>>, vector<1x128xf32>,
    } else {
    }
    %c0 = arith.constant 0 : index
    %c0_1 = arith.constant 0 : index
    %c0_2 = arith.constant 0 : index
    %3 = vector.load %arg2[%c0, %c0_1, %c0_2] : memref<1x8x128xf32, #tpu.memory_space<vmem>>, vector<1x8x128xf32>
    %4 = vector.shape_cast %3 : vector<1x8x128xf32> to vector<8x128xf32>
    %c0_3 = arith.constant 0 : index
    %c0_4 = arith.constant 0 : index
    %5 = vector.load %arg3[%c0_3, %c0_4] : memref<128x128xf32, #tpu.memory_space<vmem>>, vector<128x128xf32>
    %cst = arith.constant dense<0.000000e+00> : vector<8x128xf32>
    %6 = tpu.matmul %4, %5, %cst {dimension_numbers = #tpu.dot_dimension_numbers<[1], [0], [0], [1], [0, 0, 1, 1], [], []>} : vector<8x128xf32>, vector<128x128xf32>, vector<8x128xf32> -> vector<8x128xf32>
    %cst_5 = arith.constant 0.000000e+00 : f32
    %7 = vector.broadcast %cst_5 : f32 to vector<8x128xf32>
    %8 = arith.maximumf %6, %7 : vector<8x128xf32>
    %c0_6 = arith.constant 0 : index
    %c0_7 = arith.constant 0 : index
    %9 = vector.load %arg4[%c0_6, %c0_7] : memref<128x1xf32, #tpu.memory_space<vmem>>, vector<128x1xf32>
    %cst_8 = arith.constant dense<0.000000e+00> : vector<8x1xf32>
    %10 = tpu.matmul %8, %9, %cst_8 {dimension_numbers = #tpu.dot_dimension_numbers<[1], [0], [0], [1], [0, 0, 1, 1], [], []>} : vector<8x128xf32>, vector<128x1xf32>, vector<8x1xf32> -> vector<8x1xf32>
    %11 = tpu.iota {dimensions = array<i32: 0>} : vector<8x1xi32>
    %c8_i32 = arith.constant 8 : i32
    %12 = arith.muli %arg1, %c8_i32 : i32
    %13 = vector.broadcast %12 : i32 to vector<8x1xi32>
    %14 = arith.addi %11, %13 : vector<8x1xi32>
    %c20_i32 = arith.constant 20 : i32
    %15 = vector.broadcast %c20_i32 : i32 to vector<8x1xi32>
    %16 = arith.cmpi slt, %14, %15 : vector<8x1xi32>
    %cst_9 = arith.constant 0xFF800000 : f32
    %17 = vector.broadcast %cst_9 : f32 to vector<8x1xf32>
    %18 = arith.select %16, %10, %17 : vector<8x1xi1>, vector<8x1xf32>
    %c0_10 = arith.constant 0 : index
    %c0_11 = arith.constant 0 : index
    %19 = vector.load %arg6[%c0_10, %c0_11] : memref<1x1xf32, #tpu.memory_space<vmem>>, vector<1x1xf32>
    %cst_12 = arith.constant dense<0xFF800000> : vector<1xf32>
    %20 = vector.multi_reduction <maximumf>, %18, %cst_12 [0] : vector<8x1xf32> to vector<1xf32>
    %21 = vector.shape_cast %20 : vector<1xf32> to vector<1x1xf32>
    %22 = arith.maximumf %19, %21 : vector<1x1xf32>
    %23 = arith.subf %19, %22 : vector<1x1xf32>
    %24 = math.exp %23 : vector<1x1xf32>
    %25 = vector.broadcast %22 : vector<1x1xf32> to vector<8x1xf32>
    %26 = arith.subf %18, %25 : vector<8x1xf32>
    %27 = math.exp %26 : vector<8x1xf32>
    %c0_13 = arith.constant 0 : index
    %c0_14 = arith.constant 0 : index
    %28 = vector.load %arg7[%c0_13, %c0_14] : memref<1x1xf32, #tpu.memory_space<vmem>>, vector<1x1xf32>
    %29 = arith.mulf %24, %28 : vector<1x1xf32>
    %cst_15 = arith.constant dense<0.000000e+00> : vector<1xf32>
    %30 = vector.multi_reduction <add>, %27, %cst_15 [0] : vector<8x1xf32> to vector<1xf32>
    %31 = vector.shape_cast %30 : vector<1xf32> to vector<1x1xf32>
    %32 = arith.addf %29, %31 : vector<1x1xf32>
    %c0_16 = arith.constant 0 : index
    %c0_17 = arith.constant 0 : index
    %33 = vector.load %arg7[%c0_16, %c0_17] : memref<1x1xf32, #tpu.memory_space<vmem>>, vector<1x1xf32>
    tpu.vector_store %arg7[%c0_16, %c0_17], %32 {strides = array<i32>} : memref<1x1xf32, #tpu.memory_space<vmem>>, vector<1x1xf32>,
    %cst_18 = arith.constant dense<0.000000e+00> : vector<1x128xf32>
    %34 = tpu.matmul %27, %4, %cst_18 {dimension_numbers = #tpu.dot_dimension_numbers<[0], [0], [1], [1], [0, 1, 1, 1], [], []>} : vector<8x1xf32>, vector<8x128xf32>, vector<1x128xf32> -> vector<1x128xf32>
    %c0_19 = arith.constant 0 : index
    %c0_20 = arith.constant 0 : index
    %35 = vector.load %arg8[%c0_19, %c0_20] : memref<1x128xf32, #tpu.memory_space<vmem>>, vector<1x128xf32>
    %36 = vector.broadcast %24 : vector<1x1xf32> to vector<1x128xf32>
    %37 = arith.mulf %36, %35 : vector<1x128xf32>
    %38 = arith.addf %37, %34 : vector<1x128xf32>
    %c0_21 = arith.constant 0 : index
    %c0_22 = arith.constant 0 : index
    %39 = vector.load %arg8[%c0_21, %c0_22] : memref<1x128xf32, #tpu.memory_space<vmem>>, vector<1x128xf32>
    tpu.vector_store %arg8[%c0_21, %c0_22], %38 {strides = array<i32>} : memref<1x128xf32, #tpu.memory_space<vmem>>, vector<1x128xf32>,
    %c0_23 = arith.constant 0 : index
    %c0_24 = arith.constant 0 : index
    %40 = vector.load %arg6[%c0_23, %c0_24] : memref<1x1xf32, #tpu.memory_space<vmem>>, vector<1x1xf32>
    tpu.vector_store %arg6[%c0_23, %c0_24], %22 {strides = array<i32>} : memref<1x1xf32, #tpu.memory_space<vmem>>, vector<1x1xf32>,
    %c2_i32 = arith.constant 2 : i32
    %41 = arith.cmpi eq, %arg1, %c2_i32 : i32
    %42 = arith.extui %41 : i1 to i32
    %c0_i32_25 = arith.constant 0 : i32
    %43 = arith.cmpi ne, %42, %c0_i32_25 : i32
    scf.if %43 {
      %c0_26 = arith.constant 0 : index
      %c0_27 = arith.constant 0 : index
      %44 = vector.load %arg7[%c0_26, %c0_27] : memref<1x1xf32, #tpu.memory_space<vmem>>, vector<1x1xf32>
      %45 = tpu.reciprocal %44 : vector<1x1xf32> -> vector<1x1xf32>
      %c0_28 = arith.constant 0 : index
      %c0_29 = arith.constant 0 : index
      %46 = vector.load %arg8[%c0_28, %c0_29] : memref<1x128xf32, #tpu.memory_space<vmem>>, vector<1x128xf32>
      %47 = vector.broadcast %45 : vector<1x1xf32> to vector<1x128xf32>
      %48 = arith.mulf %46, %47 : vector<1x128xf32>
      %c0_30 = arith.constant 0 : index
      %c0_31 = arith.constant 0 : index
      %c0_32 = arith.constant 0 : index
      %49 = vector.load %arg5[%c0_30, %c0_31, %c0_32] : memref<1x1x128xf32, #tpu.memory_space<vmem>>, vector<1x1x128xf32>
      %50 = vector.shape_cast %49 : vector<1x1x128xf32> to vector<1x128xf32>
      %51 = vector.shape_cast %48 : vector<1x128xf32> to vector<1x1x128xf32>
      tpu.vector_store %arg5[%c0_30, %c0_31, %c0_32], %51 {strides = array<i32>} : memref<1x1x128xf32, #tpu.memory_space<vmem>>, vector<1x1x128xf32>,
    } else {
    }
    return
  }
  func.func @transform_0(%arg0: i32, %arg1: i32) -> (i32, i32, i32) {
    %c0_i32 = arith.constant 0 : i32
    %c0_i32_0 = arith.constant 0 : i32
    return %arg0, %arg1, %c0_i32 : i32, i32, i32
  }
  func.func @transform_1(%arg0: i32, %arg1: i32) -> (i32, i32) {
    %c0_i32 = arith.constant 0 : i32
    %c0_i32_0 = arith.constant 0 : i32
    %c0_i32_1 = arith.constant 0 : i32
    return %c0_i32, %c0_i32_0 : i32, i32
  }
  func.func @transform_2(%arg0: i32, %arg1: i32) -> (i32, i32) {
    %c0_i32 = arith.constant 0 : i32
    %c0_i32_0 = arith.constant 0 : i32
    %c0_i32_1 = arith.constant 0 : i32
    return %c0_i32, %c0_i32_0 : i32, i32
  }
  func.func @transform_3(%arg0: i32, %arg1: i32) -> (i32, i32, i32) {
    %c0_i32 = arith.constant 0 : i32
    %c0_i32_0 = arith.constant 0 : i32
    %c0_i32_1 = arith.constant 0 : i32
    return %arg0, %c0_i32, %c0_i32_0 : i32, i32, i32
  }
}

</mosaic_0001>

<llo_original>
// kernel: tpu_custom_call.1
$region0: #{tpu_custom_call.1}
  #allocation0 [shape = 'u32[]', space=smem, size = 0x4, offset = 0x4, fixed_abs, tag = 'smem constant byte address 0x4 - core index']
  #allocation1 [shape = 'u32[144,128]{1,0:T(1,128)}', space=vmem, size = 0x12000, scoped, tag = 'internal scratch']
  #allocation2 [shape = 'f32[1,1]{1,0:T(1,128)}', space=vmem, size = 0x200, scoped, tag = 'scratch operand']
  #allocation3 [shape = 'f32[1,1]{1,0:T(1,128)}', space=vmem, size = 0x200, scoped, tag = 'scratch operand']
  #allocation4 [shape = 'f32[1,128]{1,0:T(1,128)}', space=vmem, size = 0x200, scoped, tag = 'scratch operand']
  %s0 = inlined_call_operand.hbm [shape: f32[2,24,128], index: 0, kind: input, shape index: {}]
  %s1 = inlined_call_operand.vmem [shape: f32[128,128], index: 1, kind: input, shape index: {}]
  %s2 = inlined_call_operand.vmem [shape: f32[128,1], index: 2, kind: input, shape index: {}]
  %s3 = inlined_call_operand.hbm [shape: f32[2,1,128], index: 3, kind: output, shape index: {}]
  %s4 = sld [smem:[#allocation0]]
  $region57: #{tpu_custom_call.1} parent=0
    _
  %s6 = ssub.s32 1, %s4
  %s7 = scalar_select 0, %s6, %s4
  $region1: #{tpu_custom_call.1} parent=0
    #allocation5 [shape = 'u8[8192]{0}', space=vmem, size = 0x2000, scoped, tag = 'input window, operand 0']
    #allocation6 [shape = 's32[2]{0}', space=sflag, size = 0x8, scoped, tag = 'scoped memory for tpu_custom_call.1']
    #allocation7 [shape = 's32[2]{0}', space=sflag, size = 0x8, scoped, tag = 'scoped memory for tpu_custom_call.1']
    #allocation8 [shape = 'u8[1024]{0}', space=vmem, size = 0x400, scoped, tag = 'output window, operand 0']
    %8 = vsyncpa [#allocation6], 0
    %s9 = scalar_lea.sflag [#allocation6], 1
    %10 = vsyncpa %s9, 0
    %11 = vsyncpa [#allocation7], 0
    %s12 = scalar_lea.sflag [#allocation7], 1
    %13 = vsyncpa %s12, 0
    loop: start=0, step=1, limit=8
    $region2: #{tpu_custom_call.1} parent=1 // loop_pre_header
      _
    $region3: #{tpu_custom_call.1} parent=1 // loop_header
      %s15 = sphi 0, %s19
      %p16 = scmp.ge.s32.totalorder %s15, 8
      %s22 = sphi 0, %s34
      %s23 = sphi 0, %s30
      %s24 = sphi 0, %s22
      %s25 = sphi 0, %s23
      %s26 = sphi 0, %s24
      %s27 = sphi 0, %s25
      %s39 = sphi 0, %s41
      %s42 = sphi 0, %s39
      %s43 = sphi 0, %s42
      %s59 = sphi 0, %s43
      %s63 = sphi 0, %s63
      %s65 = sphi 0, %s63
      %s66 = sphi 0, %s65
      %s80 = sphi 0, %s66
      %s84 = sphi 0, %s84
      %s86 = sphi 0, %s84
      %s87 = sphi 0, %s86
      %s101 = sphi 0, %s87
      %s107 = sphi 0, %s109
      %s110 = sphi 0, %s107
      %s111 = sphi 0, %s110
      %s127 = sphi 0, %s111
    $region4: #{tpu_custom_call.1} parent=1 // loop_header_branch
      %18 = sbr.rel (%p16) target = $region8
    $region5: #{tpu_custom_call.1} parent=1 // loop_body
      %s20 = ssub.s32 %s15, 1
      %s21 = ssub.s32 %s15, 2
      %s28 = sadd.s32 1, %s23
      %p29 = scmp.ge.s32.totalorder %s28, 3
      %s30 = scalar_select %p29, 0, %s28
      %s31 = sadd.s32 1, %s22
      %s32 = scalar_select %p29, %s31, %s22
      %p33 = scmp.ge.s32.totalorder %s32, 2
      %s34 = scalar_select %p33, 0, %s32
      %s35 = ssub.s32 %s22, %s34
      %s36 = ssub.s32 %s23, %s30
      %s37 = sor.u32 %s35, %s36
      %p38 = scmp.eq.s32.totalorder %s37, 0
      %s40 = sadd.s32 %s39, 1
      %s41 = scalar_select %p38, %s39, %s40
      %p44 = pneg %p38
      %p45 = scmp.eq.s32.totalorder %s15, 5
      %p46 = por %p44, %p45
      %p47 = scmp.ne.s32.totalorder %s39, %s42
      %p48 = scmp.eq.s32.totalorder %s15, 0
      %p49 = por %p47, %p48
      %p50 = scmp.ne.s32.totalorder %s39, %s42
      %p51 = scmp.eq.s32.totalorder %s20, 5
      %p52 = por %p50, %p51
      %p53 = scmp.ne.s32.totalorder %s42, %s43
      %p54 = scmp.eq.s32.totalorder %s20, 0
      %p55 = por %p53, %p54
      %p56 = scmp.ne.s32.totalorder %s42, %s43
      %p57 = scmp.eq.s32.totalorder %s21, 5
      %p58 = por %p56, %p57
      %p60 = scmp.ne.s32.totalorder %s43, %s59
      %p61 = scmp.eq.s32.totalorder %s21, 0
      %p62 = por %p60, %p61
      %s64 = sadd.s32 %s63, 1
      %p67 = scmp.eq.s32.totalorder %s15, 5
      %p68 = scmp.ne.s32.totalorder %s63, %s65
      %p69 = scmp.eq.s32.totalorder %s15, 0
      %p70 = por %p68, %p69
      %p71 = scmp.ne.s32.totalorder %s63, %s65
      %p72 = scmp.eq.s32.totalorder %s20, 5
      %p73 = por %p71, %p72
      %p74 = scmp.ne.s32.totalorder %s65, %s66
      %p75 = scmp.eq.s32.totalorder %s20, 0
      %p76 = por %p74, %p75
      %p77 = scmp.ne.s32.totalorder %s65, %s66
      %p78 = scmp.eq.s32.totalorder %s21, 5
      %p79 = por %p77, %p78
      %p81 = scmp.ne.s32.totalorder %s66, %s80
      %p82 = scmp.eq.s32.totalorder %s21, 0
      %p83 = por %p81, %p82
      %s85 = sadd.s32 %s84, 1
      %p88 = scmp.eq.s32.totalorder %s15, 5
      %p89 = scmp.ne.s32.totalorder %s84, %s86
      %p90 = scmp.eq.s32.totalorder %s15, 0
      %p91 = por %p89, %p90
      %p92 = scmp.ne.s32.totalorder %s84, %s86
      %p93 = scmp.eq.s32.totalorder %s20, 5
      %p94 = por %p92, %p93
      %p95 = scmp.ne.s32.totalorder %s86, %s87
      %p96 = scmp.eq.s32.totalorder %s20, 0
      %p97 = por %p95, %p96
      %p98 = scmp.ne.s32.totalorder %s86, %s87
      %p99 = scmp.eq.s32.totalorder %s21, 5
      %p100 = por %p98, %p99
      %p102 = scmp.ne.s32.totalorder %s87, %s101
      %p103 = scmp.eq.s32.totalorder %s21, 0
      %p104 = por %p102, %p103
      %s105 = ssub.s32 %s22, %s34
      %p106 = scmp.eq.s32.totalorder %s105, 0
      %s108 = sadd.s32 %s107, 1
      %s109 = scalar_select %p106, %s107, %s108
      %p112 = pneg %p106
      %p113 = scmp.eq.s32.totalorder %s15, 5
      %p114 = por %p112, %p113
      %p115 = scmp.ne.s32.totalorder %s107, %s110
      %p116 = scmp.eq.s32.totalorder %s15, 0
      %p117 = por %p115, %p116
      %p118 = scmp.ne.s32.totalorder %s107, %s110
      %p119 = scmp.eq.s32.totalorder %s20, 5
      %p120 = por %p118, %p119
      %p121 = scmp.ne.s32.totalorder %s110, %s111
      %p122 = scmp.eq.s32.totalorder %s20, 0
      %p123 = por %p121, %p122
      %p124 = scmp.ne.s32.totalorder %s110, %s111
      %p125 = scmp.eq.s32.totalorder %s21, 5
      %p126 = por %p124, %p125
      %p128 = scmp.ne.s32.totalorder %s111, %s127
      %p129 = scmp.eq.s32.totalorder %s21, 0
      %p130 = por %p128, %p129
      %p131 = scmp.le.s32.totalorder 1, %s15
      %p132 = scmp.lt.s32.totalorder %s15, 7
      %p133 = pnand %p131, %p132
      %p134 = pneg %p133
      // Predicated region
      $region9: #{tpu_custom_call.1} parent=5 // pred_check
        _
      $region10: #{tpu_custom_call.1} parent=5 // pred_check_branch
        %136 = sbr.rel (%p133) target = $region12
      $region11: #{tpu_custom_call.1} parent=5 // pred_region
        %s137 = ssub.s32 %s15, 1
        // Predicated region
        $region13: #{tpu_custom_call.1} parent=11 // pred_check
          %p138 = pneg %p76
        $region14: #{tpu_custom_call.1} parent=11 // pred_check_branch
          %140 = sbr.rel (%p138) target = $region16
        $region15: #{tpu_custom_call.1} parent=11 // pred_region
          _
        $region16: #{tpu_custom_call.1} parent=11 // pred_fallthru
          _
        // Predicated region
        $region17: #{tpu_custom_call.1} parent=11 // pred_check
          %p141 = pneg %p97
        $region18: #{tpu_custom_call.1} parent=11 // pred_check_branch
          %143 = sbr.rel (%p141) target = $region20
        $region19: #{tpu_custom_call.1} parent=11 // pred_region
          _
        $region20: #{tpu_custom_call.1} parent=11 // pred_fallthru
          _
      $region12: #{tpu_custom_call.1} parent=5 // pred_fallthru
        _
      %p144 = scmp.lt.s32.totalorder %s15, 6
      // Predicated region
      $region21: #{tpu_custom_call.1} parent=5 // pred_check
        %p145 = pneg %p144
      $region22: #{tpu_custom_call.1} parent=5 // pred_check_branch
        %147 = sbr.rel (%p145) target = $region24
      $region23: #{tpu_custom_call.1} parent=5 // pred_region
        // Predicated region
        $region25: #{tpu_custom_call.1} parent=23 // pred_check
          %p148 = pneg %p49
        $region26: #{tpu_custom_call.1} parent=23 // pred_check_branch
          %150 = sbr.rel (%p148) target = $region28
        $region27: #{tpu_custom_call.1} parent=23 // pred_region
          %s151 = sand.u32 %s39, 1
          %s152 = scalar_lea.sflag [#allocation6], %s151
          %s153 = sand.u32 %s39, 1
          %s154 = smul.addr %s153, 8
          %s155 = scalar_lea.vmem [#allocation5], %s154
          %s157 = ssub.s32 128, 128
          %158 = vsyncadd %s152, %s157
          %s159 = smul.addr %s22, 3
          %s160 = sadd.s32 %s23, %s159
          %s161 = smul.addr %s160, 128
          %s162 = scalar_lea.hbm %s0, %s161
          %s164 = sshll.u32 %s155, 4
          %s165 = int_to_ptr.vmem [resolvable:$true] %s164
          %167 = dma.hbm_to_vmem [thread:$0]  %s162, 128, %s165, %s152
        $region28: #{tpu_custom_call.1} parent=23 // pred_fallthru
          _
      $region24: #{tpu_custom_call.1} parent=5 // pred_fallthru
        _
      %p168 = scmp.le.s32.totalorder 1, %s15
      %p169 = scmp.lt.s32.totalorder %s15, 7
      %p170 = pnand %p168, %p169
      %p171 = pneg %p170
      // Predicated region
      $region29: #{tpu_custom_call.1} parent=5 // pred_check
        _
      $region30: #{tpu_custom_call.1} parent=5 // pred_check_branch
        %173 = sbr.rel (%p170) target = $region32
      $region31: #{tpu_custom_call.1} parent=5 // pred_region
        %s174 = ssub.s32 %s15, 1
        %s175 = sand.u32 %s42, 1
        %s176 = scalar_lea.sflag [#allocation6], %s175
        %s177 = sand.u32 %s42, 1
        %s178 = smul.addr %s177, 8
        %s179 = scalar_lea.vmem [#allocation5], %s178
        // Predicated region
        $region33: #{tpu_custom_call.1} parent=31 // pred_check
          %p180 = pneg %p55
        $region34: #{tpu_custom_call.1} parent=31 // pred_check_branch
          %182 = sbr.rel (%p180) target = $region36
        $region35: #{tpu_custom_call.1} parent=31 // pred_region
          %183 = dma.done %s176, 128
        $region36: #{tpu_custom_call.1} parent=31 // pred_fallthru
          _
        %s184 = sand.u32 %s42, 1
        %s185 = scalar_lea.sflag [#allocation6], %s184
        %s186 = sand.u32 %s42, 1
        %s187 = smul.addr %s186, 8
        %s188 = scalar_lea.vmem [#allocation5], %s187
        %p189 = pneg %p55
        %p190 = pneg %p52
        %p191 = pneg %p76
        %p192 = pneg %p73
        %p193 = pneg %p97
        %p194 = pneg %p94
        %p195 = pneg %p123
        %p196 = pneg %p120
        %s197 = sand.u32 %s110, 1
        %s198 = scalar_lea.sflag [#allocation7], %s197
        %s199 = sand.u32 %s110, 1
        %s200 = scalar_lea.vmem [#allocation8], %s199
        %p201 = scmp.eq.s32.totalorder %s25, 0
        // Predicated region
        $region37: #{tpu_custom_call.1} parent=31 // pred_check
          %p202 = pneg %p201
        $region38: #{tpu_custom_call.1} parent=31 // pred_check_branch
          %204 = sbr.rel (%p202) target = $region40
        $region39: #{tpu_custom_call.1} parent=31 // pred_region
          %vm205 = vcmask 0
          %206 = vst.msk [vmem:[#allocation2] sm:$0x1] %vm205, -inf
          %207 = vst.msk [vmem:[#allocation3] sm:$0x1] %vm205, 0.0
          %208 = vst [vmem:[#allocation4] sm:$0x1] 0.0
        $region40: #{tpu_custom_call.1} parent=31 // pred_fallthru
          _
        %v209 = vld [vmem:[%s179] sm:$0xff]
        %v210 = vld [vmem:[%s1] sm:$0xff]
        %v211 = vld [vmem:[%s1 + $0x8] sm:$0xff]
        %v212 = vld [vmem:[%s1 + $0x10] sm:$0xff]
        %v213 = vld [vmem:[%s1 + $0x18] sm:$0xff]
        %v214 = vld [vmem:[%s1 + $0x20] sm:$0xff]
        %v215 = vld [vmem:[%s1 + $0x28] sm:$0xff]
        %v216 = vld [vmem:[%s1 + $0x30] sm:$0xff]
        %v217 = vld [vmem:[%s1 + $0x38] sm:$0xff]
        %v218 = vld [vmem:[%s1 + $0x40] sm:$0xff]
        %v219 = vld [vmem:[%s1 + $0x48] sm:$0xff]
        %v220 = vld [vmem:[%s1 + $0x50] sm:$0xff]
        %v221 = vld [vmem:[%s1 + $0x58] sm:$0xff]
        %v222 = vld [vmem:[%s1 + $0x60] sm:$0xff]
        %v223 = vld [vmem:[%s1 + $0x68] sm:$0xff]
        %v224 = vld [vmem:[%s1 + $0x70] sm:$0xff]
        %v225 = vld [vmem:[%s1 + $0x78] sm:$0xff]
        %226 = vmatprep.subr.mxu0 0.0
        %227 = vmatpush1.msra.mxu0 %v210
        %228 = vmatprep.subr.mxu0 0.0
        %229 = vmatpush1.msra.mxu0 %v211
        %230 = vmatprep.subr.mxu0 0.0
        %231 = vmatpush1.msra.mxu0 %v212
        %232 = vmatprep.subr.mxu0 0.0
        %233 = vmatpush1.msra.mxu0 %v213
        %234 = vmatprep.subr.mxu0 0.0
        %235 = vmatpush1.msra.mxu0 %v214
        %236 = vmatprep.subr.mxu0 0.0
        %237 = vmatpush1.msra.mxu0 %v215
        %238 = vmatprep.subr.mxu0 0.0
        %239 = vmatpush1.msra.mxu0 %v216
        %240 = vmatprep.subr.mxu0 0.0
        %241 = vmatpush1.msra.mxu0 %v217
        %242 = vmatprep.subr.mxu0 0.0
        %243 = vmatpush1.msra.mxu0 %v218
        %244 = vmatprep.subr.mxu0 0.0
        %245 = vmatpush1.msra.mxu0 %v219
        %246 = vmatprep.subr.mxu0 0.0
        %247 = vmatpush1.msra.mxu0 %v220
        %248 = vmatprep.subr.mxu0 0.0
        %249 = vmatpush1.msra.mxu0 %v221
        %250 = vmatprep.subr.mxu0 0.0
        %251 = vmatpush1.msra.mxu0 %v222
        %252 = vmatprep.subr.mxu0 0.0
        %253 = vmatpush1.msra.mxu0 %v223
        %254 = vmatprep.subr.mxu0 0.0
        %255 = vmatpush1.msra.mxu0 %v224
        %256 = vmatprep.subr.mxu0 0.0
        %257 = vmatpush1.msra.mxu0 %v225
        %258 = vmatprep.subr.mxu0 0.0
        %259 = vmatpush1.msra.mxu0 0.0
        %260 = vmatprep.subr.mxu0 0.0
        %261 = vmatpush1.msra.mxu0 0.0
        %262 = vmatprep.subr.mxu0 0.0
        %263 = vmatpush1.msra.mxu0 0.0
        %264 = vmatprep.subr.mxu0 0.0
        %265 = vmatpush1.msra.mxu0 0.0
        %266 = vmatprep.subr.mxu0 0.0
        %267 = vmatpush1.msra.mxu0 0.0
        %268 = vmatprep.subr.mxu0 0.0
        %269 = vmatpush1.msra.mxu0 0.0
        %270 = vmatprep.subr.mxu0 0.0
        %271 = vmatpush1.msra.mxu0 0.0
        %272 = vmatprep.subr.mxu0 0.0
        %273 = vmatpush1.msra.mxu0 0.0
        %274 = vmatprep.subr.mxu0 0.0
        %275 = vmatpush1.msra.mxu0 0.0
        %276 = vmatprep.subr.mxu0 0.0
        %277 = vmatpush1.msra.mxu0 0.0
        %278 = vmatprep.subr.mxu0 0.0
        %279 = vmatpush1.msra.mxu0 0.0
        %280 = vmatprep.subr.mxu0 0.0
        %281 = vmatpush1.msra.mxu0 0.0
        %282 = vmatprep.subr.mxu0 0.0
        %283 = vmatpush1.msra.mxu0 0.0
        %284 = vmatprep.subr.mxu0 0.0
        %285 = vmatpush1.msra.mxu0 0.0
        %286 = vmatprep.subr.mxu0 0.0
        %287 = vmatpush1.msra.mxu0 0.0
        %288 = vmatprep.subr.mxu0 0.0
        %289 = vmatpush1.msra.mxu0 0.0
        %290 = vmatprep.mubr.f32.mxu0 0.0
        %291 = vmatmul.mubr.f32.gmra.mrb[0].mxu0 %v209
        %v292 = vpop.f32.mrb[0].mxu0
        %v293 = vadd.f32 0.0, %v292
        %v294 = vpop.f32.mrb[0].mxu0
        %295 = vdwg.mxu0
        %v296 = vmax.f32 %v293, 0.0
        %v297 = vld [vmem:[%s2] sm:$0xff]
        %v298 = vld [vmem:[%s2 + $0x8] sm:$0xff]
        %v299 = vld [vmem:[%s2 + $0x10] sm:$0xff]
        %v300 = vld [vmem:[%s2 + $0x18] sm:$0xff]
        %v301 = vld [vmem:[%s2 + $0x20] sm:$0xff]
        %v302 = vld [vmem:[%s2 + $0x28] sm:$0xff]
        %v303 = vld [vmem:[%s2 + $0x30] sm:$0xff]
        %v304 = vld [vmem:[%s2 + $0x38] sm:$0xff]
        %v305 = vld [vmem:[%s2 + $0x40] sm:$0xff]
        %v306 = vld [vmem:[%s2 + $0x48] sm:$0xff]
        %v307 = vld [vmem:[%s2 + $0x50] sm:$0xff]
        %v308 = vld [vmem:[%s2 + $0x58] sm:$0xff]
        %v309 = vld [vmem:[%s2 + $0x60] sm:$0xff]
        %v310 = vld [vmem:[%s2 + $0x68] sm:$0xff]
        %v311 = vld [vmem:[%s2 + $0x70] sm:$0xff]
        %v312 = vld [vmem:[%s2 + $0x78] sm:$0xff]
        %313 = vmatprep.subr.mxu0 0.0
        %314 = vmatpush1.msra.mxu0 %v297
        %315 = vmatprep.subr.mxu0 0.0
        %316 = vmatpush1.msra.mxu0 %v298
        %317 = vmatprep.subr.mxu0 0.0
        %318 = vmatpush1.msra.mxu0 %v299
        %319 = vmatprep.subr.mxu0 0.0
        %320 = vmatpush1.msra.mxu0 %v300
        %321 = vmatprep.subr.mxu0 0.0
        %322 = vmatpush1.msra.mxu0 %v301
        %323 = vmatprep.subr.mxu0 0.0
        %324 = vmatpush1.msra.mxu0 %v302
        %325 = vmatprep.subr.mxu0 0.0
        %326 = vmatpush1.msra.mxu0 %v303
        %327 = vmatprep.subr.mxu0 0.0
        %328 = vmatpush1.msra.mxu0 %v304
        %329 = vmatprep.subr.mxu0 0.0
        %330 = vmatpush1.msra.mxu0 %v305
        %331 = vmatprep.subr.mxu0 0.0
        %332 = vmatpush1.msra.mxu0 %v306
        %333 = vmatprep.subr.mxu0 0.0
        %334 = vmatpush1.msra.mxu0 %v307
        %335 = vmatprep.subr.mxu0 0.0
        %336 = vmatpush1.msra.mxu0 %v308
        %337 = vmatprep.subr.mxu0 0.0
        %338 = vmatpush1.msra.mxu0 %v309
        %339 = vmatprep.subr.mxu0 0.0
        %340 = vmatpush1.msra.mxu0 %v310
        %341 = vmatprep.subr.mxu0 0.0
        %342 = vmatpush1.msra.mxu0 %v311
        %343 = vmatprep.subr.mxu0 0.0
        %344 = vmatpush1.msra.mxu0 %v312
        %345 = vmatprep.subr.mxu0 0.0
        %346 = vmatpush1.msra.mxu0 0.0
        %347 = vmatprep.subr.mxu0 0.0
        %348 = vmatpush1.msra.mxu0 0.0
        %349 = vmatprep.subr.mxu0 0.0
        %350 = vmatpush1.msra.mxu0 0.0
        %351 = vmatprep.subr.mxu0 0.0
        %352 = vmatpush1.msra.mxu0 0.0
        %353 = vmatprep.subr.mxu0 0.0
        %354 = vmatpush1.msra.mxu0 0.0
        %355 = vmatprep.subr.mxu0 0.0
        %356 = vmatpush1.msra.mxu0 0.0
        %357 = vmatprep.subr.mxu0 0.0
        %358 = vmatpush1.msra.mxu0 0.0
        %359 = vmatprep.subr.mxu0 0.0
        %360 = vmatpush1.msra.mxu0 0.0
        %361 = vmatprep.subr.mxu0 0.0
        %362 = vmatpush1.msra.mxu0 0.0
        %363 = vmatprep.subr.mxu0 0.0
        %364 = vmatpush1.msra.mxu0 0.0
        %365 = vmatprep.subr.mxu0 0.0
        %366 = vmatpush1.msra.mxu0 0.0
        %367 = vmatprep.subr.mxu0 0.0
        %368 = vmatpush1.msra.mxu0 0.0
        %369 = vmatprep.subr.mxu0 0.0
        %370 = vmatpush1.msra.mxu0 0.0
        %371 = vmatprep.subr.mxu0 0.0
        %372 = vmatpush1.msra.mxu0 0.0
        %373 = vmatprep.subr.mxu0 0.0
        %374 = vmatpush1.msra.mxu0 0.0
        %375 = vmatprep.subr.mxu0 0.0
        %376 = vmatpush1.msra.mxu0 0.0
        %377 = vmatprep.mubr.f32.mxu0 0.0
        %378 = vmatmul.mubr.f32.gmra.mrb[0].mxu0 %v296
        %v379 = vpop.f32.mrb[0].mxu0
        %v380 = vadd.f32 0.0, %v379
        %v381 = vpop.f32.mrb[0].mxu0
        %382 = vdwg.mxu0
        %v383 = vlaneseq
        %v384 = vshrl.u32 %v383, 7
        %s385 = smul.u32 %s25, 8
        %v386 = vstv %s385
        %v387 = vadd.s32 %v384, %v386
        %vm388 = vcmp.lt.s32.totalorder %v387, 20
        %v389 = vsel %vm388, %v380, -inf
        %v390 = vld [vmem:[#allocation2] sm:$0x1]
        %vm391 = vcmask 7168
        %v392 = vsel %vm391, %v389, -inf
        %v393 = vrot.slane %v392, 4
        %v394 = vmax.f32 %v392, %v393
        %v395 = vrot.slane %v394, 2
        %v396 = vmax.f32 %v394, %v395
        %v397 = vrot.slane %v396, 1
        %v398 = vmax.f32 %v396, %v397
        %v399 = vmax.f32 %v390, %v398
        %v400 = vsub.f32 %v390, %v399
        %v401 = vmul.f32 %v400, 1.442695
        %v402 = vpow.pop %v401
        %v404 = vlaneseq
        %v405 = vshrl.u32 %v404, 7
        %v406 = vsub.s32 0, %v405
        %v407 = vrot.slane %v399, %v406
        %v409 = vsub.f32 %v389, %v407
        %v410 = vmul.f32 %v409, 1.442695
        %v411 = vpow.pop %v410
        %v412 = vld [vmem:[#allocation3] sm:$0x1]
        %v413 = vmul.f32 %v402, %v412
        %v414 = vsel %vm391, %v411, 0.0
        %v415 = vrot.slane %v414, 4
        %v416 = vadd.f32 %v414, %v415
        %v417 = vrot.slane %v416, 2
        %v418 = vadd.f32 %v416, %v417
        %v419 = vrot.slane %v418, 1
        %v420 = vadd.f32 %v418, %v419
        %v421 = vadd.f32 %v413, %v420
        %vm422 = vcmask 0
        %423 = vst.msk [vmem:[#allocation3] sm:$0x1] %vm422, %v421
        %424 = vxpose.xlu0.b32.start [1/16] %v411, 128
        %425 = vxpose.xlu0.b32.cont [2/16] 0.0, 128
        %426 = vxpose.xlu0.b32.cont [3/16] 0.0, 128
        %427 = vxpose.xlu0.b32.cont [4/16] 0.0, 128
        %428 = vxpose.xlu0.b32.cont [5/16] 0.0, 128
        %429 = vxpose.xlu0.b32.cont [6/16] 0.0, 128
        %430 = vxpose.xlu0.b32.cont [7/16] 0.0, 128
        %431 = vxpose.xlu0.b32.cont [8/16] 0.0, 128
        %432 = vxpose.xlu0.b32.cont [9/16] 0.0, 128
        %433 = vxpose.xlu0.b32.cont [10/16] 0.0, 128
        %434 = vxpose.xlu0.b32.cont [11/16] 0.0, 128
        %435 = vxpose.xlu0.b32.cont [12/16] 0.0, 128
        %436 = vxpose.xlu0.b32.cont [13/16] 0.0, 128
        %437 = vxpose.xlu0.b32.cont [14/16] 0.0, 128
        %438 = vxpose.xlu0.b32.cont [15/16] 0.0, 128
        %439 = vxpose.xlu0.b32.end [16/16] 0.0, 128
        %v440 = vpop.trf.xlu0
        %v441 = vpop.trf.xlu0
        %v442 = vpop.trf.xlu0
        %v443 = vpop.trf.xlu0
        %v444 = vpop.trf.xlu0
        %v445 = vpop.trf.xlu0
        %v446 = vpop.trf.xlu0
        %v447 = vpop.trf.xlu0
        %v448 = vpop.trf.xlu0
        %v449 = vpop.trf.xlu0
        %v450 = vpop.trf.xlu0
        %v451 = vpop.trf.xlu0
        %v452 = vpop.trf.xlu0
        %v453 = vpop.trf.xlu0
        %v454 = vpop.trf.xlu0
        %v455 = vpop.trf.xlu0
        %vm456 = vcmask 64512
        %v458 = vsel %vm456, %v440, 0
        %460 = vmatprep.subr.mxu0 0.0
        %461 = vmatpush1.msra.mxu0 %v209
        %462 = vmatprep.subr.mxu0 0.0
        %463 = vmatpush1.msra.mxu0 0.0
        %464 = vmatprep.subr.mxu0 0.0
        %465 = vmatpush1.msra.mxu0 0.0
        %466 = vmatprep.subr.mxu0 0.0
        %467 = vmatpush1.msra.mxu0 0.0
        %468 = vmatprep.subr.mxu0 0.0
        %469 = vmatpush1.msra.mxu0 0.0
        %470 = vmatprep.subr.mxu0 0.0
        %471 = vmatpush1.msra.mxu0 0.0
        %472 = vmatprep.subr.mxu0 0.0
        %473 = vmatpush1.msra.mxu0 0.0
        %474 = vmatprep.subr.mxu0 0.0
        %475 = vmatpush1.msra.mxu0 0.0
        %476 = vmatprep.subr.mxu0 0.0
        %477 = vmatpush1.msra.mxu0 0.0
        %478 = vmatprep.subr.mxu0 0.0
        %479 = vmatpush1.msra.mxu0 0.0
        %480 = vmatprep.subr.mxu0 0.0
        %481 = vmatpush1.msra.mxu0 0.0
        %482 = vmatprep.subr.mxu0 0.0
        %483 = vmatpush1.msra.mxu0 0.0
        %484 = vmatprep.subr.mxu0 0.0
        %485 = vmatpush1.msra.mxu0 0.0
        %486 = vmatprep.subr.mxu0 0.0
        %487 = vmatpush1.msra.mxu0 0.0
        %488 = vmatprep.subr.mxu0 0.0
        %489 = vmatpush1.msra.mxu0 0.0
        %490 = vmatprep.subr.mxu0 0.0
        %491 = vmatpush1.msra.mxu0 0.0
        %492 = vmatprep.subr.mxu0 0.0
        %493 = vmatpush1.msra.mxu0 0.0
        %494 = vmatprep.subr.mxu0 0.0
        %495 = vmatpush1.msra.mxu0 0.0
        %496 = vmatprep.subr.mxu0 0.0
        %497 = vmatpush1.msra.mxu0 0.0
        %498 = vmatprep.subr.mxu0 0.0
        %499 = vmatpush1.msra.mxu0 0.0
        %500 = vmatprep.subr.mxu0 0.0
        %501 = vmatpush1.msra.mxu0 0.0
        %502 = vmatprep.subr.mxu0 0.0
        %503 = vmatpush1.msra.mxu0 0.0
        %504 = vmatprep.subr.mxu0 0.0
        %505 = vmatpush1.msra.mxu0 0.0
        %506 = vmatprep.subr.mxu0 0.0
        %507 = vmatpush1.msra.mxu0 0.0
        %508 = vmatprep.subr.mxu0 0.0
        %509 = vmatpush1.msra.mxu0 0.0
        %510 = vmatprep.subr.mxu0 0.0
        %511 = vmatpush1.msra.mxu0 0.0
        %512 = vmatprep.subr.mxu0 0.0
        %513 = vmatpush1.msra.mxu0 0.0
        %514 = vmatprep.subr.mxu0 0.0
        %515 = vmatpush1.msra.mxu0 0.0
        %516 = vmatprep.subr.mxu0 0.0
        %517 = vmatpush1.msra.mxu0 0.0
        %518 = vmatprep.subr.mxu0 0.0
        %519 = vmatpush1.msra.mxu0 0.0
        %520 = vmatprep.subr.mxu0 0.0
        %521 = vmatpush1.msra.mxu0 0.0
        %522 = vmatprep.subr.mxu0 0.0
        %523 = vmatpush1.msra.mxu0 0.0
        %524 = vmatprep.mubr.f32.mxu0 0.0
        %525 = vmatmul.mubr.f32.gmra.mrb[0].mxu0 %v458
        %v526 = vpop.f32.mrb[0].mxu0
        %v527 = vadd.f32 0.0, %v526
        %v528 = vpop.f32.mrb[0].mxu0
        %529 = vdwg.mxu0
        %v530 = vld [vmem:[#allocation4] sm:$0x1]
        %532 = vset.pattern.permute.xlu0 0
        %533 = vperm.xlu0 %532, %v402
        %v534 = vpop.permute.xlu0 %533
        %v536 = vlaneseq
        %v537 = vshrl.u32 %v536, 7
        %v538 = vsub.s32 0, %v537
        %v539 = vrot.slane %v534, %v538
        %v540 = vmul.f32 %v539, %v530
        %v541 = vadd.f32 %v540, %v527
        %542 = vst [vmem:[#allocation4] sm:$0x1] %v541
        %543 = vst.msk [vmem:[#allocation2] sm:$0x1] %vm422, %v399
        %p544 = scmp.eq.s32.totalorder %s25, 2
        // Predicated region
        $region41: #{tpu_custom_call.1} parent=31 // pred_check
          %p545 = pneg %p544
        $region42: #{tpu_custom_call.1} parent=31 // pred_check_branch
          %547 = sbr.rel (%p545) target = $region44
        $region43: #{tpu_custom_call.1} parent=31 // pred_region
          %v548 = vld [vmem:[#allocation3] sm:$0x1]
          %v549 = vrcp.pop %v548
          %v550 = vld [vmem:[#allocation4] sm:$0x1]
          %552 = vset.pattern.permute.xlu0 0
          %553 = vperm.xlu0 %552, %v549
          %v554 = vpop.permute.xlu0 %553
          %v556 = vlaneseq
          %v557 = vshrl.u32 %v556, 7
          %v558 = vsub.s32 0, %v557
          %v559 = vrot.slane %v554, %v558
          %v560 = vmul.f32 %v550, %v559
          %561 = vst [vmem:[%s200] sm:$0x1] %v560
        $region44: #{tpu_custom_call.1} parent=31 // pred_fallthru
          _
        %s562 = sand.u32 %s110, 1
        %s563 = scalar_lea.sflag [#allocation7], %s562
        %s564 = sand.u32 %s110, 1
        %s565 = scalar_lea.vmem [#allocation8], %s564
        // Predicated region
        $region45: #{tpu_custom_call.1} parent=31 // pred_check
          %p566 = pneg %p120
        $region46: #{tpu_custom_call.1} parent=31 // pred_check_branch
          %568 = sbr.rel (%p566) target = $region48
        $region47: #{tpu_custom_call.1} parent=31 // pred_region
          %s570 = ssub.s32 16, 16
          %571 = vsyncadd %s563, %s570
          %s572 = smul.addr %s24, 16
          %s573 = scalar_lea.hbm %s3, %s572
          %s575 = sshll.u32 %s565, 4
          %s576 = int_to_ptr.vmem [resolvable:$true] %s575
          %578 = dma.vmem_to_hbm [thread:$0]  %s576, 16, %s573, %s563
        $region48: #{tpu_custom_call.1} parent=31 // pred_fallthru
          _
      $region32: #{tpu_custom_call.1} parent=5 // pred_fallthru
        _
      %p579 = scmp.le.s32.totalorder 2, %s15
      // Predicated region
      $region49: #{tpu_custom_call.1} parent=5 // pred_check
        %p580 = pneg %p579
      $region50: #{tpu_custom_call.1} parent=5 // pred_check_branch
        %582 = sbr.rel (%p580) target = $region52
      $region51: #{tpu_custom_call.1} parent=5 // pred_region
        %s583 = ssub.s32 %s15, 2
        // Predicated region
        $region53: #{tpu_custom_call.1} parent=51 // pred_check
          %p584 = pneg %p126
        $region54: #{tpu_custom_call.1} parent=51 // pred_check_branch
          %586 = sbr.rel (%p584) target = $region56
        $region55: #{tpu_custom_call.1} parent=51 // pred_region
          %s587 = sand.u32 %s111, 1
          %s588 = scalar_lea.sflag [#allocation7], %s587
          %s589 = sand.u32 %s111, 1
          %s590 = scalar_lea.vmem [#allocation8], %s589
          %591 = dma.done %s588, 16
        $region56: #{tpu_custom_call.1} parent=51 // pred_fallthru
          _
      $region52: #{tpu_custom_call.1} parent=5 // pred_fallthru
        _
    $region6: #{tpu_custom_call.1} parent=1 // loop_footer
      %s19 = sadd.s32 1, %s15
    $region7: #{tpu_custom_call.1} parent=1 // loop_footer_branch
      %14 = sbr.rel target = $region3
    $region8: #{tpu_custom_call.1} parent=1 // loop_exit
      _
    %592 = vsyncpa [#allocation6], 1
    %s593 = scalar_lea.sflag [#allocation6], 1
    %594 = vsyncpa %s593, 1
    %595 = vsyncpa [#allocation7], 1
    %s596 = scalar_lea.sflag [#allocation7], 1
    %597 = vsyncpa %s596, 1

</llo_original>
